<compile_context>
chip_gen: v6e
topology: v6e:2x2x1
jax: 0.10.0
libtpu: 0.0.40
codegen_flags: <defaults>
</compile_context>

<pallas_src>
import functools
import numpy as np

import jax
import jax.numpy as jnp
from jax import lax
from jax.experimental import pallas as pl
from jax.experimental.pallas import tpu as pltpu

_MB = 1024 * 1024


# ---------------------------------------------------------------------------
# Trace-time hardware queries (safe fallbacks when not on a TPU)
# ---------------------------------------------------------------------------
def _device_kind() -> str:
    try:
        return jax.devices()[0].device_kind.lower()
    except Exception:
        return ""


def _vmem_capacity_bytes() -> int:
    try:
        return int(pltpu.get_tpu_info().vmem_capacity_bytes)
    except Exception:
        return 64 * _MB                      # conservative default (v7x per-TC)


def _dim_semantics(n_axes: int):
    """v7x has 2 TensorCores per chip and per-TC HBM bandwidth: shard the
    leading (batch) grid axis across cores.  Elsewhere plain 'parallel'."""
    if "v7" in _device_kind():
        core_par = getattr(pltpu, "CORE_PARALLEL", pltpu.PARALLEL)
        return (core_par,) + (pltpu.PARALLEL,) * (n_axes - 1)
    return (pltpu.PARALLEL,) * n_axes


def _budgets():
    """(per-tile byte budget for pass 2, vmem_limit_bytes), VMEM-capacity aware."""
    cap = _vmem_capacity_bytes()
    if cap >= 96 * _MB:                      # v5e / v6e: 128 MiB physical VMEM
        return 6 * _MB, 64 * _MB
    return 3 * _MB, 48 * _MB                 # v7x: 64 MiB per TensorCore


# ---------------------------------------------------------------------------
# Pass 1: per-batch channel-shared DropBlock keep-mask (unscaled, bf16)
# ---------------------------------------------------------------------------
def _mask_kernel(gamma_ref, u_ref, mask_ref, *, block_size):
    H, W = u_ref.shape                                        # (H, W) per batch
    gamma = gamma_ref[0]                                      # drop_prob / bs**2
    seed = (u_ref[...] < gamma).astype(jnp.bfloat16)          # Bernoulli {0,1}

    # stride-1 max-pool, kernel=block_size, pad=block_size//2, as two 2-D
    # banded bf16 matmuls: count[i,j] = sum of seeds in the window; keep if 0.
    pad = block_size // 2
    lo, hi = -pad, block_size - pad - 1                       # window offsets

    def band(n, transpose):
        r = lax.broadcasted_iota(jnp.int32, (n, n), 0)
        c = lax.broadcasted_iota(jnp.int32, (n, n), 1)
        d = (r - c) if transpose else (c - r)
        return ((d >= lo) & (d <= hi)).astype(jnp.bfloat16)

    a_h = band(H, transpose=False)            # a_h[i, k] = 1 iff (k - i) in window
    a_w = band(W, transpose=True)             # a_w[l, j] = 1 iff (l - j) in window

    cnt = jnp.dot(seed, a_w, preferred_element_type=jnp.float32)      # pool W
    cnt = jnp.dot(a_h, cnt.astype(jnp.bfloat16),                      # pool H
                  preferred_element_type=jnp.float32)

    mask_ref[...] = (cnt <= 0.0).astype(jnp.bfloat16)         # 1 = keep, 0 = drop


# ---------------------------------------------------------------------------
# Pass 2: tiled, lane-dense elementwise apply   out = x * mask * scale
# ---------------------------------------------------------------------------
def _apply_kernel(scale_ref, x_ref, m_ref, o_ref, *, compute_dtype):
    scale = scale_ref[0].astype(compute_dtype)                # SMEM scalar
    m = m_ref[...].astype(compute_dtype) * scale              # (1, 1,  HW)
    x = x_ref[...].astype(compute_dtype)                      # (1, TC, HW)
    o_ref[...] = (x * m).astype(o_ref.dtype)


def _choose_channel_tile(C, HW, itemsize, budget_bytes):
    """Largest channel chunk dividing C, native sublane-packed for the dtype
    (multiple of 8 for f32, 16 for bf16, 32 for int8 — or == C), whose x tile
    stays under budget_bytes."""
    sub = 8 * max(1, 4 // itemsize)
    best = None
    for t in range(1, C + 1):
        if C % t:
            continue
        if t != C and t % sub:
            continue
        if t * HW * itemsize <= budget_bytes:
            best = t
    if best is not None:
        return best
    legal = [t for t in range(1, C + 1) if C % t == 0 and (t % sub == 0 or t == C)]
    return min(legal)


@functools.partial(jax.jit, static_argnames=("block_size",))
def _dropblock_forward(x, gamma, key, *, block_size):
    B, C, H, W = x.shape
    HW = H * W
    gamma_arr = jnp.asarray(gamma, dtype=jnp.float32).reshape((1,))

    u = jax.random.uniform(key, (B, H, W), dtype=jnp.float32)

    # --- pass 1: per-batch unscaled keep-mask, gridded over B ---
    mask = pl.pallas_call(
        functools.partial(_mask_kernel, block_size=block_size),
        out_shape=jax.ShapeDtypeStruct((B, H, W), jnp.bfloat16),
        grid=(B,),
        in_specs=[
            pl.BlockSpec(memory_space=pltpu.MemorySpace.SMEM),      # gamma (1,)
            pl.BlockSpec((None, H, W), lambda b: (b, 0, 0)),        # uniforms
        ],
        out_specs=pl.BlockSpec((None, H, W), lambda b: (b, 0, 0)),
        compiler_params=pltpu.CompilerParams(
            dimension_semantics=_dim_semantics(1),
            vmem_limit_bytes=32 * _MB),
    )(gamma_arr, u)

    # --- global rescale: one tiny reduce over the (small) mask ---
    # TODO(synk): fold this sum into pass 1 as an SMEM accumulator output to
    #             avoid re-reading the mask from HBM.
    kept = jnp.sum(mask.astype(jnp.float32))
    # max(kept, 1) guard is an intentional deviation from the PyTorch reference
    # (which yields inf when every element is dropped).
    scale = (jnp.float32(B * H * W) / jnp.maximum(kept, 1.0)).reshape((1,))

    # --- pass 2: lane-dense apply.  Fold (H, W) into the last dim so stores
    # are full 128-lane vregs; tile over batch and channel chunks. ---
    x3 = x.reshape(B, C, HW)
    m3 = mask.reshape(B, 1, HW)

    tile_budget, vmem_limit = _budgets()
    tc = _choose_channel_tile(C, HW, x.dtype.itemsize, tile_budget)

    kind = _device_kind()
    if x.dtype == jnp.bfloat16 and ("v6" in kind or "v7" in kind):
        compute_dtype = jnp.bfloat16            # native bf16 VALU, halves vregs
    else:
        compute_dtype = jnp.float32             # f32 inputs / v5e (no bf16 VALU)

    # NOTE: for very small HW, pipeline_mode=pl.Buffered(3) on x/out specs can
    # hide DMA-issue latency; left at the default double-buffering here.
    y3 = pl.pallas_call(
        functools.partial(_apply_kernel, compute_dtype=compute_dtype),
        out_shape=jax.ShapeDtypeStruct((B, C, HW), x.dtype),
        grid=(B, C // tc),
        in_specs=[
            pl.BlockSpec(memory_space=pltpu.MemorySpace.SMEM),      # scale (1,)
            pl.BlockSpec((1, tc, HW), lambda b, c: (b, c, 0)),      # x tile
            pl.BlockSpec((1, 1, HW), lambda b, c: (b, 0, 0)),       # shared mask
        ],
        out_specs=pl.BlockSpec((1, tc, HW), lambda b, c: (b, c, 0)),
        compiler_params=pltpu.CompilerParams(
            dimension_semantics=_dim_semantics(2),
            vmem_limit_bytes=vmem_limit),
    )(scale, x3, m3)

    return y3.reshape(B, C, H, W)


# ---------------------------------------------------------------------------
# Module wrappers mirroring the PyTorch code
# ---------------------------------------------------------------------------
class DropBlock2D:
    """JAX/Pallas counterpart of the PyTorch DropBlock2D the scheduler wraps."""

    def __init__(self, drop_prob, block_size):
        self.drop_prob = float(drop_prob)
        self.block_size = int(block_size)
        self.training = True
        self._auto_calls = 0

    def __call__(self, x, key=None):
        # eval / drop_prob == 0 -> exact identity, no HBM round trip.
        if (not self.training) or self.drop_prob == 0.0:
            return x
        if key is None:
            # Fold a call counter in so repeated calls don't replay one pattern.
            key = jax.random.fold_in(jax.random.PRNGKey(0), self._auto_calls)
            self._auto_calls += 1
        gamma = jnp.float32(self.drop_prob / (self.block_size ** 2))
        return _dropblock_forward(x, gamma, key, block_size=self.block_size)


class LinearScheduler:
    """forward(x) == dropblock(x); step() updates drop_prob on the host."""

    def __init__(self, dropblock, start_value, stop_value, nr_steps):
        self.dropblock = dropblock
        self.i = 0
        self.drop_values = np.linspace(start=start_value, stop=stop_value,
                                       num=int(nr_steps))

    def __call__(self, x, key=None):
        return self.dropblock(x, key)

    def step(self):
        if self.i < len(self.drop_values):
            self.dropblock.drop_prob = float(self.drop_values[self.i])
        self.i += 1


# ---------------------------------------------------------------------------
# Pure-JAX reference (for correctness checking only)
# ---------------------------------------------------------------------------
def _dropblock_reference(x, u, gamma, block_size):
    B, C, H, W = x.shape
    seed = (u < gamma).astype(jnp.float32)                    # (B, H, W)
    pad = block_size // 2
    pooled = lax.reduce_window(
        seed, -jnp.inf, lax.max,
        window_dimensions=(1, block_size, block_size),
        window_strides=(1, 1, 1),
        padding=((0, 0), (pad, block_size - pad - 1), (pad, block_size - pad - 1)))
    block_mask = 1.0 - pooled
    scale = (B * H * W) / jnp.maximum(jnp.sum(block_mask), 1.0)
    return x * block_mask[:, None, :, :] * scale


if __name__ == "__main__":
    root = jax.random.PRNGKey(0)
    kx, kd = jax.random.split(root)
    x = jax.random.normal(kx, (2, 4, 16, 16), dtype=jnp.float32)   # NCHW

    block_size = 3
    sched = LinearScheduler(DropBlock2D(drop_prob=0.0, block_size=block_size),
                            start_value=0.0, stop_value=0.25, nr_steps=5)

    # Step 0: drop_prob == 0 -> forward must be an exact identity.
    y0 = jax.block_until_ready(sched(x, kd))
    assert y0.shape == x.shape and y0.dtype == x.dtype
    assert bool(jnp.all(y0 == x))

    # Advance the schedule; run the Pallas kernels with non-zero drop prob.
    for _ in range(5):
        sched.step()
    drop_prob = sched.dropblock.drop_prob
    assert drop_prob > 0.0

    y1 = jax.block_until_ready(sched(x, kd))
    assert y1.shape == x.shape and y1.dtype == x.dtype
    assert bool(jnp.all(jnp.isfinite(y1)))

    # Check against a pure-JAX reference using the same randomness.
    gamma = jnp.float32(drop_prob / (block_size ** 2))
    u = jax.random.uniform(kd, (x.shape[0], x.shape[2], x.shape[3]),
                           dtype=jnp.float32)
    y_ref = _dropblock_reference(x, u, gamma, block_size)
    assert bool(jnp.allclose(y1, y_ref, rtol=1e-5, atol=1e-5))

    print("KERNEL_OK")
</pallas_src>

<mosaic_0001>
module attributes {stable_mosaic.version = 11 : i64} {
  func.func @_mask_kernel(%arg0: i32, %arg1: memref<1xf32, #tpu.memory_space<smem>>, %arg2: memref<1x16x16xf32, #tpu.memory_space<vmem>>, %arg3: memref<1x16x16xbf16, #tpu.memory_space<vmem>>) attributes {dimension_semantics = [#tpu.dimension_semantics<parallel>], iteration_bounds = array<i64: 2>, scalar_prefetch = 0 : i64, scratch_operands = 0 : i64, tpu.core_type = #tpu.core_type<tc>, window_params = [{transform_indices = @transform_0, window_bounds = array<i64: 1>}, {transform_indices = @transform_1, window_bounds = array<i64: 1, 16, 16>}, {transform_indices = @transform_2, window_bounds = array<i64: 1, 16, 16>}]} {
    %c0 = arith.constant 0 : index
    %0 = memref.load %arg1[%c0] : memref<1xf32, #tpu.memory_space<smem>>
    %c0_0 = arith.constant 0 : index
    %c0_1 = arith.constant 0 : index
    %c0_2 = arith.constant 0 : index
    %1 = vector.load %arg2[%c0_0, %c0_1, %c0_2] : memref<1x16x16xf32, #tpu.memory_space<vmem>>, vector<1x16x16xf32>
    %2 = vector.shape_cast %1 : vector<1x16x16xf32> to vector<16x16xf32>
    %3 = vector.broadcast %0 : f32 to vector<16x16xf32>
    %4 = arith.cmpf olt, %2, %3 : vector<16x16xf32>
    %5 = arith.extui %4 : vector<16x16xi1> to vector<16x16xi32>
    %6 = arith.sitofp %5 : vector<16x16xi32> to vector<16x16xf32>
    %7 = arith.truncf %6 : vector<16x16xf32> to vector<16x16xbf16>
    %8 = tpu.iota {dimensions = array<i32: 0>} : vector<16x16xi32>
    %9 = tpu.iota {dimensions = array<i32: 1>} : vector<16x16xi32>
    %10 = arith.subi %9, %8 : vector<16x16xi32>
    %c-1_i32 = arith.constant -1 : i32
    %11 = vector.broadcast %c-1_i32 : i32 to vector<16x16xi32>
    %12 = arith.cmpi sge, %10, %11 : vector<16x16xi32>
    %c1_i32 = arith.constant 1 : i32
    %13 = vector.broadcast %c1_i32 : i32 to vector<16x16xi32>
    %14 = arith.cmpi sle, %10, %13 : vector<16x16xi32>
    %15 = arith.andi %12, %14 : vector<16x16xi1>
    %16 = arith.extui %15 : vector<16x16xi1> to vector<16x16xi32>
    %17 = arith.sitofp %16 : vector<16x16xi32> to vector<16x16xf32>
    %18 = arith.truncf %17 : vector<16x16xf32> to vector<16x16xbf16>
    %19 = tpu.iota {dimensions = array<i32: 0>} : vector<16x16xi32>
    %20 = tpu.iota {dimensions = array<i32: 1>} : vector<16x16xi32>
    %21 = arith.subi %19, %20 : vector<16x16xi32>
    %c-1_i32_3 = arith.constant -1 : i32
    %22 = vector.broadcast %c-1_i32_3 : i32 to vector<16x16xi32>
    %23 = arith.cmpi sge, %21, %22 : vector<16x16xi32>
    %c1_i32_4 = arith.constant 1 : i32
    %24 = vector.broadcast %c1_i32_4 : i32 to vector<16x16xi32>
    %25 = arith.cmpi sle, %21, %24 : vector<16x16xi32>
    %26 = arith.andi %23, %25 : vector<16x16xi1>
    %27 = arith.extui %26 : vector<16x16xi1> to vector<16x16xi32>
    %28 = arith.sitofp %27 : vector<16x16xi32> to vector<16x16xf32>
    %29 = arith.truncf %28 : vector<16x16xf32> to vector<16x16xbf16>
    %cst = arith.constant dense<0.000000e+00> : vector<16x16xf32>
    %30 = tpu.matmul %7, %29, %cst {dimension_numbers = #tpu.dot_dimension_numbers<[1], [0], [0], [1], [0, 0, 1, 1], [], []>} : vector<16x16xbf16>, vector<16x16xbf16>, vector<16x16xf32> -> vector<16x16xf32>
    %31 = arith.truncf %30 : vector<16x16xf32> to vector<16x16xbf16>
    %cst_5 = arith.constant dense<0.000000e+00> : vector<16x16xf32>
    %32 = tpu.matmul %18, %31, %cst_5 {dimension_numbers = #tpu.dot_dimension_numbers<[1], [0], [0], [1], [0, 0, 1, 1], [], []>} : vector<16x16xbf16>, vector<16x16xbf16>, vector<16x16xf32> -> vector<16x16xf32>
    %cst_6 = arith.constant 0.000000e+00 : f32
    %33 = vector.broadcast %cst_6 : f32 to vector<16x16xf32>
    %34 = arith.cmpf ole, %32, %33 : vector<16x16xf32>
    %35 = arith.extui %34 : vector<16x16xi1> to vector<16x16xi32>
    %36 = arith.sitofp %35 : vector<16x16xi32> to vector<16x16xf32>
    %37 = arith.truncf %36 : vector<16x16xf32> to vector<16x16xbf16>
    %c0_7 = arith.constant 0 : index
    %c0_8 = arith.constant 0 : index
    %c0_9 = arith.constant 0 : index
    %38 = vector.load %arg3[%c0_7, %c0_8, %c0_9] : memref<1x16x16xbf16, #tpu.memory_space<vmem>>, vector<1x16x16xbf16>
    %39 = vector.shape_cast %38 : vector<1x16x16xbf16> to vector<16x16xbf16>
    %40 = vector.shape_cast %37 : vector<16x16xbf16> to vector<1x16x16xbf16>
    tpu.vector_store %arg3[%c0_7, %c0_8, %c0_9], %40 {strides = array<i32>} : memref<1x16x16xbf16, #tpu.memory_space<vmem>>, vector<1x16x16xbf16>,
    return
  }
  func.func @transform_0(%arg0: i32) -> i32 {
    %c0_i32 = arith.constant 0 : i32
    %c0_i32_0 = arith.constant 0 : i32
    return %c0_i32 : i32
  }
  func.func @transform_1(%arg0: i32) -> (i32, i32, i32) {
    %c0_i32 = arith.constant 0 : i32
    %c0_i32_0 = arith.constant 0 : i32
    %c0_i32_1 = arith.constant 0 : i32
    return %arg0, %c0_i32, %c0_i32_0 : i32, i32, i32
  }
  func.func @transform_2(%arg0: i32) -> (i32, i32, i32) {
    %c0_i32 = arith.constant 0 : i32
    %c0_i32_0 = arith.constant 0 : i32
    %c0_i32_1 = arith.constant 0 : i32
    return %arg0, %c0_i32, %c0_i32_0 : i32, i32, i32
  }
}

module attributes {stable_mosaic.version = 11 : i64} {
  func.func @_apply_kernel(%arg0: i32, %arg1: i32, %arg2: memref<1xf32, #tpu.memory_space<smem>>, %arg3: memref<1x4x256xf32, #tpu.memory_space<vmem>>, %arg4: memref<1x1x256xbf16, #tpu.memory_space<vmem>>, %arg5: memref<1x4x256xf32, #tpu.memory_space<vmem>>) attributes {dimension_semantics = [#tpu.dimension_semantics<parallel>, #tpu.dimension_semantics<parallel>], iteration_bounds = array<i64: 2, 1>, scalar_prefetch = 0 : i64, scratch_operands = 0 : i64, tpu.core_type = #tpu.core_type<tc>, window_params = [{transform_indices = @transform_0, window_bounds = array<i64: 1>}, {transform_indices = @transform_1, window_bounds = array<i64: 1, 4, 256>}, {transform_indices = @transform_2, window_bounds = array<i64: 1, 1, 256>}, {transform_indices = @transform_3, window_bounds = array<i64: 1, 4, 256>}]} {
    %c0 = arith.constant 0 : index
    %0 = memref.load %arg2[%c0] : memref<1xf32, #tpu.memory_space<smem>>
    %c0_0 = arith.constant 0 : index
    %c0_1 = arith.constant 0 : index
    %c0_2 = arith.constant 0 : index
    %1 = vector.load %arg4[%c0_0, %c0_1, %c0_2] : memref<1x1x256xbf16, #tpu.memory_space<vmem>>, vector<1x1x256xbf16>
    %2 = arith.extf %1 : vector<1x1x256xbf16> to vector<1x1x256xf32>
    %3 = vector.broadcast %0 : f32 to vector<1x1x256xf32>
    %4 = arith.mulf %2, %3 : vector<1x1x256xf32>
    %c0_3 = arith.constant 0 : index
    %c0_4 = arith.constant 0 : index
    %c0_5 = arith.constant 0 : index
    %5 = vector.load %arg3[%c0_3, %c0_4, %c0_5] : memref<1x4x256xf32, #tpu.memory_space<vmem>>, vector<1x4x256xf32>
    %6 = vector.broadcast %4 : vector<1x1x256xf32> to vector<1x4x256xf32>
    %7 = arith.mulf %5, %6 : vector<1x4x256xf32>
    %c0_6 = arith.constant 0 : index
    %c0_7 = arith.constant 0 : index
    %c0_8 = arith.constant 0 : index
    %8 = vector.load %arg5[%c0_6, %c0_7, %c0_8] : memref<1x4x256xf32, #tpu.memory_space<vmem>>, vector<1x4x256xf32>
    tpu.vector_store %arg5[%c0_6, %c0_7, %c0_8], %7 {strides = array<i32>} : memref<1x4x256xf32, #tpu.memory_space<vmem>>, vector<1x4x256xf32>,
    return
  }
  func.func @transform_0(%arg0: i32, %arg1: i32) -> i32 {
    %c0_i32 = arith.constant 0 : i32
    %c0_i32_0 = arith.constant 0 : i32
    return %c0_i32 : i32
  }
  func.func @transform_1(%arg0: i32, %arg1: i32) -> (i32, i32, i32) {
    %c0_i32 = arith.constant 0 : i32
    %c0_i32_0 = arith.constant 0 : i32
    return %arg0, %arg1, %c0_i32 : i32, i32, i32
  }
  func.func @transform_2(%arg0: i32, %arg1: i32) -> (i32, i32, i32) {
    %c0_i32 = arith.constant 0 : i32
    %c0_i32_0 = arith.constant 0 : i32
    %c0_i32_1 = arith.constant 0 : i32
    return %arg0, %c0_i32, %c0_i32_0 : i32, i32, i32
  }
  func.func @transform_3(%arg0: i32, %arg1: i32) -> (i32, i32, i32) {
    %c0_i32 = arith.constant 0 : i32
    %c0_i32_0 = arith.constant 0 : i32
    return %arg0, %arg1, %c0_i32 : i32, i32, i32
  }
}

</mosaic_0001>

<llo_original>
// kernel: _dropblock_forward.3
$region0: #{_dropblock_forward.3}
  #allocation0 [shape = 'u32[]', space=smem, size = 0x4, offset = 0x4, fixed_abs, tag = 'smem constant byte address 0x4 - core index']
  #allocation1 [shape = 'u32[144,128]{1,0:T(1,128)}', space=vmem, size = 0x12000, scoped, tag = 'internal scratch']
  #allocation2 [shape = 'f32[1]{0:T(128)S(6)}', space=smem, size = 0x200, scoped, tag = 'scoped memory for _dropblock_forward.3']
  %s0 = inlined_call_operand.<no memory space> [shape: f32[1], index: 0, kind: input, shape index: {}]
  %s1 = inlined_call_operand.vmem [shape: f32[2,4,256], index: 1, kind: input, shape index: {}]
  %s2 = inlined_call_operand.vmem [shape: bf16[2,1,256], index: 2, kind: input, shape index: {}]
  %s3 = inlined_call_operand.vmem [shape: f32[2,4,256], index: 3, kind: output, shape index: {}]
  %s4 = sld [smem:[#allocation0]]
  $region45: #{_dropblock_forward.3} parent=0
    _
  %s6 = ssub.s32 1, %s4
  %s7 = scalar_select 0, %s6, %s4
  %8 = sst [smem:[#allocation2]] %s0
  loop: start=0, step=1, limit=4
  $region2: #{_dropblock_forward.3} parent=0 // loop_pre_header
    _
  $region3: #{_dropblock_forward.3} parent=0 // loop_header
    %s10 = sphi 0, %s14
    %p11 = scmp.ge.s32.totalorder %s10, 4
    %s17 = sphi 0, %s29
    %s18 = sphi 0, %s25
    %s19 = sphi 0, %s17
    %s20 = sphi 0, %s18
    %s21 = sphi 0, %s19
    %s22 = sphi 0, %s20
    %s30 = sphi 0, %s30
    %s32 = sphi 0, %s30
    %s33 = sphi 0, %s32
    %s47 = sphi 0, %s33
    %s55 = sphi 0, %s57
    %s58 = sphi 0, %s55
    %s59 = sphi 0, %s58
    %s75 = sphi 0, %s59
    %s81 = sphi 0, %s83
    %s84 = sphi 0, %s81
    %s85 = sphi 0, %s84
    %s101 = sphi 0, %s85
    %s109 = sphi 0, %s111
    %s112 = sphi 0, %s109
    %s113 = sphi 0, %s112
    %s129 = sphi 0, %s113
  $region4: #{_dropblock_forward.3} parent=0 // loop_header_branch
    %13 = sbr.rel (%p11) target = $region8
  $region5: #{_dropblock_forward.3} parent=0 // loop_body
    %s15 = ssub.s32 %s10, 1
    %s16 = ssub.s32 %s10, 2
    %s23 = sadd.s32 1, %s18
    %p24 = scmp.ge.s32.totalorder %s23, 1
    %s25 = scalar_select %p24, 0, %s23
    %s26 = sadd.s32 1, %s17
    %s27 = scalar_select %p24, %s26, %s17
    %p28 = scmp.ge.s32.totalorder %s27, 2
    %s29 = scalar_select %p28, 0, %s27
    %s31 = sadd.s32 %s30, 1
    %p34 = scmp.eq.s32.totalorder %s10, 1
    %p35 = scmp.ne.s32.totalorder %s30, %s32
    %p36 = scmp.eq.s32.totalorder %s10, 0
    %p37 = por %p35, %p36
    %p38 = scmp.ne.s32.totalorder %s30, %s32
    %p39 = scmp.eq.s32.totalorder %s15, 1
    %p40 = por %p38, %p39
    %p41 = scmp.ne.s32.totalorder %s32, %s33
    %p42 = scmp.eq.s32.totalorder %s15, 0
    %p43 = por %p41, %p42
    %p44 = scmp.ne.s32.totalorder %s32, %s33
    %p45 = scmp.eq.s32.totalorder %s16, 1
    %p46 = por %p44, %p45
    %p48 = scmp.ne.s32.totalorder %s33, %s47
    %p49 = scmp.eq.s32.totalorder %s16, 0
    %p50 = por %p48, %p49
    %s51 = ssub.s32 %s17, %s29
    %s52 = ssub.s32 %s18, %s25
    %s53 = sor.u32 %s51, %s52
    %p54 = scmp.eq.s32.totalorder %s53, 0
    %s56 = sadd.s32 %s55, 1
    %s57 = scalar_select %p54, %s55, %s56
    %p60 = pneg %p54
    %p61 = scmp.eq.s32.totalorder %s10, 1
    %p62 = por %p60, %p61
    %p63 = scmp.ne.s32.totalorder %s55, %s58
    %p64 = scmp.eq.s32.totalorder %s10, 0
    %p65 = por %p63, %p64
    %p66 = scmp.ne.s32.totalorder %s55, %s58
    %p67 = scmp.eq.s32.totalorder %s15, 1
    %p68 = por %p66, %p67
    %p69 = scmp.ne.s32.totalorder %s58, %s59
    %p70 = scmp.eq.s32.totalorder %s15, 0
    %p71 = por %p69, %p70
    %p72 = scmp.ne.s32.totalorder %s58, %s59
    %p73 = scmp.eq.s32.totalorder %s16, 1
    %p74 = por %p72, %p73
    %p76 = scmp.ne.s32.totalorder %s59, %s75
    %p77 = scmp.eq.s32.totalorder %s16, 0
    %p78 = por %p76, %p77
    %s79 = ssub.s32 %s17, %s29
    %p80 = scmp.eq.s32.totalorder %s79, 0
    %s82 = sadd.s32 %s81, 1
    %s83 = scalar_select %p80, %s81, %s82
    %p86 = pneg %p80
    %p87 = scmp.eq.s32.totalorder %s10, 1
    %p88 = por %p86, %p87
    %p89 = scmp.ne.s32.totalorder %s81, %s84
    %p90 = scmp.eq.s32.totalorder %s10, 0
    %p91 = por %p89, %p90
    %p92 = scmp.ne.s32.totalorder %s81, %s84
    %p93 = scmp.eq.s32.totalorder %s15, 1
    %p94 = por %p92, %p93
    %p95 = scmp.ne.s32.totalorder %s84, %s85
    %p96 = scmp.eq.s32.totalorder %s15, 0
    %p97 = por %p95, %p96
    %p98 = scmp.ne.s32.totalorder %s84, %s85
    %p99 = scmp.eq.s32.totalorder %s16, 1
    %p100 = por %p98, %p99
    %p102 = scmp.ne.s32.totalorder %s85, %s101
    %p103 = scmp.eq.s32.totalorder %s16, 0
    %p104 = por %p102, %p103
    %s105 = ssub.s32 %s17, %s29
    %s106 = ssub.s32 %s18, %s25
    %s107 = sor.u32 %s105, %s106
    %p108 = scmp.eq.s32.totalorder %s107, 0
    %s110 = sadd.s32 %s109, 1
    %s111 = scalar_select %p108, %s109, %s110
    %p114 = pneg %p108
    %p115 = scmp.eq.s32.totalorder %s10, 1
    %p116 = por %p114, %p115
    %p117 = scmp.ne.s32.totalorder %s109, %s112
    %p118 = scmp.eq.s32.totalorder %s10, 0
    %p119 = por %p117, %p118
    %p120 = scmp.ne.s32.totalorder %s109, %s112
    %p121 = scmp.eq.s32.totalorder %s15, 1
    %p122 = por %p120, %p121
    %p123 = scmp.ne.s32.totalorder %s112, %s113
    %p124 = scmp.eq.s32.totalorder %s15, 0
    %p125 = por %p123, %p124
    %p126 = scmp.ne.s32.totalorder %s112, %s113
    %p127 = scmp.eq.s32.totalorder %s16, 1
    %p128 = por %p126, %p127
    %p130 = scmp.ne.s32.totalorder %s113, %s129
    %p131 = scmp.eq.s32.totalorder %s16, 0
    %p132 = por %p130, %p131
    %p133 = scmp.le.s32.totalorder 1, %s10
    %p134 = scmp.lt.s32.totalorder %s10, 3
    %p135 = pnand %p133, %p134
    %p136 = pneg %p135
    // Predicated region
    $region9: #{_dropblock_forward.3} parent=5 // pred_check
      _
    $region10: #{_dropblock_forward.3} parent=5 // pred_check_branch
      %138 = sbr.rel (%p135) target = $region12
    $region11: #{_dropblock_forward.3} parent=5 // pred_region
      %s139 = ssub.s32 %s10, 1
      // Predicated region
      $region13: #{_dropblock_forward.3} parent=11 // pred_check
        %p140 = pneg %p43
      $region14: #{_dropblock_forward.3} parent=11 // pred_check_branch
        %142 = sbr.rel (%p140) target = $region16
      $region15: #{_dropblock_forward.3} parent=11 // pred_region
        _
      $region16: #{_dropblock_forward.3} parent=11 // pred_fallthru
        _
    $region12: #{_dropblock_forward.3} parent=5 // pred_fallthru
      _
    %p143 = scmp.lt.s32.totalorder %s10, 2
    // Predicated region
    $region17: #{_dropblock_forward.3} parent=5 // pred_check
      %p144 = pneg %p143
    $region18: #{_dropblock_forward.3} parent=5 // pred_check_branch
      %146 = sbr.rel (%p144) target = $region20
    $region19: #{_dropblock_forward.3} parent=5 // pred_region
      // Predicated region
      $region21: #{_dropblock_forward.3} parent=19 // pred_check
        %p147 = pneg %p65
      $region22: #{_dropblock_forward.3} parent=19 // pred_check_branch
        %149 = sbr.rel (%p147) target = $region24
      $region23: #{_dropblock_forward.3} parent=19 // pred_region
        %p150 = scmp.lt.s32.totalorder %s17, 1
        %s151 = scalar_select %p150, %s17, 1
        %p152 = scmp.lt.s32.totalorder %s18, 0
        %s153 = scalar_select %p152, %s18, 0
        %s154 = smul.addr %s153, 2
        %s155 = smul.addr %s151, 2
        %s156 = sadd.s32 %s154, %s155
        %s157 = smul.addr %s156, 4
        %s158 = scalar_lea.vmem %s1, %s157
      $region24: #{_dropblock_forward.3} parent=19 // pred_fallthru
        _
      // Predicated region
      $region25: #{_dropblock_forward.3} parent=19 // pred_check
        %p159 = pneg %p91
      $region26: #{_dropblock_forward.3} parent=19 // pred_check_branch
        %161 = sbr.rel (%p159) target = $region28
      $region27: #{_dropblock_forward.3} parent=19 // pred_region
        %p162 = scmp.lt.s32.totalorder %s17, 1
        %s163 = scalar_select %p162, %s17, 1
        %s164 = smul.addr %s163, 2
        %s165 = scalar_lea.vmem %s2, %s164
      $region28: #{_dropblock_forward.3} parent=19 // pred_fallthru
        _
    $region20: #{_dropblock_forward.3} parent=5 // pred_fallthru
      _
    %p166 = scmp.le.s32.totalorder 1, %s10
    %p167 = scmp.lt.s32.totalorder %s10, 3
    %p168 = pnand %p166, %p167
    %p169 = pneg %p168
    // Predicated region
    $region29: #{_dropblock_forward.3} parent=5 // pred_check
      _
    $region30: #{_dropblock_forward.3} parent=5 // pred_check_branch
      %171 = sbr.rel (%p168) target = $region32
    $region31: #{_dropblock_forward.3} parent=5 // pred_region
      %s172 = ssub.s32 %s10, 1
      %p173 = pneg %p43
      %p174 = pneg %p40
      %p175 = scmp.lt.s32.totalorder %s19, 1
      %s176 = scalar_select %p175, %s19, 1
      %p177 = scmp.lt.s32.totalorder %s20, 0
      %s178 = scalar_select %p177, %s20, 0
      %s179 = smul.addr %s178, 2
      %s180 = smul.addr %s176, 2
      %s181 = sadd.s32 %s179, %s180
      %s182 = smul.addr %s181, 4
      %s183 = scalar_lea.vmem %s1, %s182
      %p184 = pneg %p71
      %p185 = pneg %p68
      %p186 = scmp.lt.s32.totalorder %s19, 1
      %s187 = scalar_select %p186, %s19, 1
      %s188 = smul.addr %s187, 2
      %s189 = scalar_lea.vmem %s2, %s188
      %p190 = pneg %p97
      %p191 = pneg %p94
      %p192 = pneg %p125
      %p193 = pneg %p122
      %p194 = scmp.lt.s32.totalorder %s19, 1
      %s195 = scalar_select %p194, %s19, 1
      %p196 = scmp.lt.s32.totalorder %s20, 0
      %s197 = scalar_select %p196, %s20, 0
      %s198 = smul.addr %s197, 2
      %s199 = smul.addr %s195, 2
      %s200 = sadd.s32 %s198, %s199
      %s201 = smul.addr %s200, 4
      %s202 = scalar_lea.vmem %s3, %s201
      %p203 = scmp.lt.s32.totalorder %s19, 1
      %s204 = scalar_select %p203, %s19, 1
      %p205 = scmp.lt.s32.totalorder %s20, 0
      %s206 = scalar_select %p205, %s20, 0
      %s207 = smul.addr %s206, 2
      %s208 = smul.addr %s204, 2
      %s209 = sadd.s32 %s207, %s208
      %s210 = smul.addr %s209, 4
      %s211 = scalar_lea.vmem %s1, %s210
      %p212 = scmp.lt.s32.totalorder %s19, 1
      %s213 = scalar_select %p212, %s19, 1
      %s214 = smul.addr %s213, 2
      %s215 = scalar_lea.vmem %s2, %s214
      %p216 = scmp.lt.s32.totalorder %s19, 1
      %s217 = scalar_select %p216, %s19, 1
      %p218 = scmp.lt.s32.totalorder %s20, 0
      %s219 = scalar_select %p218, %s20, 0
      %s220 = smul.addr %s219, 2
      %s221 = smul.addr %s217, 2
      %s222 = sadd.s32 %s220, %s221
      %s223 = smul.addr %s222, 4
      %s224 = scalar_lea.vmem %s3, %s223
      %s225 = sld [smem:[#allocation2]]
      %v226 = vld [vmem:[%s215] sm:$0x3]
      %v227 = vunpack.c.l.bf16 %v226
      %v228 = vstv %s225
      %v229 = vmul.f32 %v227, %v228
      %v230 = vld [vmem:[%s211] sm:$0xff]
      %v232 = vlaneseq
      %v233 = vshrl.u32 %v232, 7
      %v234 = vsub.s32 0, %v233
      %v235 = vrot.slane %v229, %v234
      %v236 = vlaneseq
      %v237 = vshrl.u32 %v236, 7
      %v238 = vsub.s32 2, %v237
      %v239 = vrot.slane %v229, %v238
      %v242 = vlaneseq
      %v243 = vshrl.u32 %v242, 7
      %v244 = vsub.s32 0, %v243
      %v245 = vrot.slane %v235, %v244
      %v246 = vlaneseq
      %v247 = vshrl.u32 %v246, 7
      %v248 = vsub.s32 0, %v247
      %v249 = vrot.slane %v239, %v248
      %v252 = vcombine.low %v245, %v249
      %v254 = vmul.f32 %v230, %v252
      %255 = vst [vmem:[%s224] sm:$0xff] %v254
      %p256 = scmp.lt.s32.totalorder %s19, 1
      %s257 = scalar_select %p256, %s19, 1
      %p258 = scmp.lt.s32.totalorder %s20, 0
      %s259 = scalar_select %p258, %s20, 0
      %s260 = smul.addr %s259, 2
      %s261 = smul.addr %s257, 2
      %s262 = sadd.s32 %s260, %s261
      %s263 = smul.addr %s262, 4
      %s264 = scalar_lea.vmem %s3, %s263
      // Predicated region
      $region33: #{_dropblock_forward.3} parent=31 // pred_check
        %p265 = pneg %p122
      $region34: #{_dropblock_forward.3} parent=31 // pred_check_branch
        %267 = sbr.rel (%p265) target = $region36
      $region35: #{_dropblock_forward.3} parent=31 // pred_region
        _
      $region36: #{_dropblock_forward.3} parent=31 // pred_fallthru
        _
    $region32: #{_dropblock_forward.3} parent=5 // pred_fallthru
      _
    %p268 = scmp.le.s32.totalorder 2, %s10
    // Predicated region
    $region37: #{_dropblock_forward.3} parent=5 // pred_check
      %p269 = pneg %p268
    $region38: #{_dropblock_forward.3} parent=5 // pred_check_branch
      %271 = sbr.rel (%p269) target = $region40
    $region39: #{_dropblock_forward.3} parent=5 // pred_region
      %s272 = ssub.s32 %s10, 2
      // Predicated region
      $region41: #{_dropblock_forward.3} parent=39 // pred_check
        %p273 = pneg %p128
      $region42: #{_dropblock_forward.3} parent=39 // pred_check_branch
        %275 = sbr.rel (%p273) target = $region44
      $region43: #{_dropblock_forward.3} parent=39 // pred_region
        %p276 = scmp.lt.s32.totalorder %s21, 1
        %s277 = scalar_select %p276, %s21, 1
        %p278 = scmp.lt.s32.totalorder %s22, 0
        %s279 = scalar_select %p278, %s22, 0
        %s280 = smul.addr %s279, 2
        %s281 = smul.addr %s277, 2
        %s282 = sadd.s32 %s280, %s281
        %s283 = smul.addr %s282, 4
        %s284 = scalar_lea.vmem %s3, %s283
      $region44: #{_dropblock_forward.3} parent=39 // pred_fallthru
        _
    $region40: #{_dropblock_forward.3} parent=5 // pred_fallthru
      _
  $region6: #{_dropblock_forward.3} parent=0 // loop_footer
    %s14 = sadd.s32 1, %s10
  $region7: #{_dropblock_forward.3} parent=0 // loop_footer_branch
    %9 = sbr.rel target = $region3
  $region8: #{_dropblock_forward.3} parent=0 // loop_exit
    _

// kernel: _dropblock_forward.2
$region0: #{_dropblock_forward.2}
  #allocation0 [shape = 'u32[]', space=smem, size = 0x4, offset = 0x4, fixed_abs, tag = 'smem constant byte address 0x4 - core index']
  #allocation1 [shape = 'u32[144,128]{1,0:T(1,128)}', space=vmem, size = 0x12000, scoped, tag = 'internal scratch']
  #allocation2 [shape = 'f32[1]{0:T(128)S(6)}', space=smem, size = 0x200, scoped, tag = 'scoped memory for _dropblock_forward.2']
  %s0 = inlined_call_operand.<no memory space> [shape: f32[1], index: 0, kind: input, shape index: {}]
  %s1 = inlined_call_operand.vmem [shape: f32[2,16,16], index: 1, kind: input, shape index: {}]
  %s2 = inlined_call_operand.vmem [shape: bf16[2,16,16], index: 2, kind: output, shape index: {}]
  %s3 = sld [smem:[#allocation0]]
  $region41: #{_dropblock_forward.2} parent=0
    _
  %s5 = ssub.s32 1, %s3
  %s6 = scalar_select 0, %s5, %s3
  %7 = sst [smem:[#allocation2]] %s0
  loop: start=0, step=1, limit=4
  $region2: #{_dropblock_forward.2} parent=0 // loop_pre_header
    _
  $region3: #{_dropblock_forward.2} parent=0 // loop_header
    %s9 = sphi 0, %s13
    %p10 = scmp.ge.s32.totalorder %s9, 4
    %s17 = sphi 0, %s17
    %s19 = sphi 0, %s17
    %s20 = sphi 0, %s19
    %s34 = sphi 0, %s20
    %s40 = sphi 0, %s42
    %s43 = sphi 0, %s40
    %s44 = sphi 0, %s43
    %s60 = sphi 0, %s44
    %s66 = sphi 0, %s68
    %s69 = sphi 0, %s66
    %s70 = sphi 0, %s69
    %s86 = sphi 0, %s70
  $region4: #{_dropblock_forward.2} parent=0 // loop_header_branch
    %12 = sbr.rel (%p10) target = $region8
  $region5: #{_dropblock_forward.2} parent=0 // loop_body
    %s14 = ssub.s32 %s9, 1
    %s15 = ssub.s32 %s9, 2
    %s16 = sadd.s32 %s9, 1
    %s18 = sadd.s32 %s17, 1
    %p21 = scmp.eq.s32.totalorder %s9, 1
    %p22 = scmp.ne.s32.totalorder %s17, %s19
    %p23 = scmp.eq.s32.totalorder %s9, 0
    %p24 = por %p22, %p23
    %p25 = scmp.ne.s32.totalorder %s17, %s19
    %p26 = scmp.eq.s32.totalorder %s14, 1
    %p27 = por %p25, %p26
    %p28 = scmp.ne.s32.totalorder %s19, %s20
    %p29 = scmp.eq.s32.totalorder %s14, 0
    %p30 = por %p28, %p29
    %p31 = scmp.ne.s32.totalorder %s19, %s20
    %p32 = scmp.eq.s32.totalorder %s15, 1
    %p33 = por %p31, %p32
    %p35 = scmp.ne.s32.totalorder %s20, %s34
    %p36 = scmp.eq.s32.totalorder %s15, 0
    %p37 = por %p35, %p36
    %s38 = ssub.s32 %s9, %s16
    %p39 = scmp.eq.s32.totalorder %s38, 0
    %s41 = sadd.s32 %s40, 1
    %s42 = scalar_select %p39, %s40, %s41
    %p45 = pneg %p39
    %p46 = scmp.eq.s32.totalorder %s9, 1
    %p47 = por %p45, %p46
    %p48 = scmp.ne.s32.totalorder %s40, %s43
    %p49 = scmp.eq.s32.totalorder %s9, 0
    %p50 = por %p48, %p49
    %p51 = scmp.ne.s32.totalorder %s40, %s43
    %p52 = scmp.eq.s32.totalorder %s14, 1
    %p53 = por %p51, %p52
    %p54 = scmp.ne.s32.totalorder %s43, %s44
    %p55 = scmp.eq.s32.totalorder %s14, 0
    %p56 = por %p54, %p55
    %p57 = scmp.ne.s32.totalorder %s43, %s44
    %p58 = scmp.eq.s32.totalorder %s15, 1
    %p59 = por %p57, %p58
    %p61 = scmp.ne.s32.totalorder %s44, %s60
    %p62 = scmp.eq.s32.totalorder %s15, 0
    %p63 = por %p61, %p62
    %s64 = ssub.s32 %s9, %s16
    %p65 = scmp.eq.s32.totalorder %s64, 0
    %s67 = sadd.s32 %s66, 1
    %s68 = scalar_select %p65, %s66, %s67
    %p71 = pneg %p65
    %p72 = scmp.eq.s32.totalorder %s9, 1
    %p73 = por %p71, %p72
    %p74 = scmp.ne.s32.totalorder %s66, %s69
    %p75 = scmp.eq.s32.totalorder %s9, 0
    %p76 = por %p74, %p75
    %p77 = scmp.ne.s32.totalorder %s66, %s69
    %p78 = scmp.eq.s32.totalorder %s14, 1
    %p79 = por %p77, %p78
    %p80 = scmp.ne.s32.totalorder %s69, %s70
    %p81 = scmp.eq.s32.totalorder %s14, 0
    %p82 = por %p80, %p81
    %p83 = scmp.ne.s32.totalorder %s69, %s70
    %p84 = scmp.eq.s32.totalorder %s15, 1
    %p85 = por %p83, %p84
    %p87 = scmp.ne.s32.totalorder %s70, %s86
    %p88 = scmp.eq.s32.totalorder %s15, 0
    %p89 = por %p87, %p88
    %p90 = scmp.le.s32.totalorder 1, %s9
    %p91 = scmp.lt.s32.totalorder %s9, 3
    %p92 = pnand %p90, %p91
    %p93 = pneg %p92
    // Predicated region
    $region9: #{_dropblock_forward.2} parent=5 // pred_check
      _
    $region10: #{_dropblock_forward.2} parent=5 // pred_check_branch
      %95 = sbr.rel (%p92) target = $region12
    $region11: #{_dropblock_forward.2} parent=5 // pred_region
      %s96 = ssub.s32 %s9, 1
      // Predicated region
      $region13: #{_dropblock_forward.2} parent=11 // pred_check
        %p97 = pneg %p30
      $region14: #{_dropblock_forward.2} parent=11 // pred_check_branch
        %99 = sbr.rel (%p97) target = $region16
      $region15: #{_dropblock_forward.2} parent=11 // pred_region
        _
      $region16: #{_dropblock_forward.2} parent=11 // pred_fallthru
        _
    $region12: #{_dropblock_forward.2} parent=5 // pred_fallthru
      _
    %p100 = scmp.lt.s32.totalorder %s9, 2
    // Predicated region
    $region17: #{_dropblock_forward.2} parent=5 // pred_check
      %p101 = pneg %p100
    $region18: #{_dropblock_forward.2} parent=5 // pred_check_branch
      %103 = sbr.rel (%p101) target = $region20
    $region19: #{_dropblock_forward.2} parent=5 // pred_region
      // Predicated region
      $region21: #{_dropblock_forward.2} parent=19 // pred_check
        %p104 = pneg %p50
      $region22: #{_dropblock_forward.2} parent=19 // pred_check_branch
        %106 = sbr.rel (%p104) target = $region24
      $region23: #{_dropblock_forward.2} parent=19 // pred_region
        %p107 = scmp.lt.s32.totalorder %s9, 1
        %s108 = scalar_select %p107, %s9, 1
        %s109 = smul.addr %s108, 2
        %s110 = smul.addr %s109, 8
        %s111 = scalar_lea.vmem %s1, %s110
      $region24: #{_dropblock_forward.2} parent=19 // pred_fallthru
        _
    $region20: #{_dropblock_forward.2} parent=5 // pred_fallthru
      _
    %p112 = scmp.le.s32.totalorder 1, %s9
    %p113 = scmp.lt.s32.totalorder %s9, 3
    %p114 = pnand %p112, %p113
    %p115 = pneg %p114
    // Predicated region
    $region25: #{_dropblock_forward.2} parent=5 // pred_check
      _
    $region26: #{_dropblock_forward.2} parent=5 // pred_check_branch
      %117 = sbr.rel (%p114) target = $region28
    $region27: #{_dropblock_forward.2} parent=5 // pred_region
      %s118 = ssub.s32 %s9, 1
      %p119 = pneg %p30
      %p120 = pneg %p27
      %p121 = scmp.lt.s32.totalorder %s14, 1
      %s122 = scalar_select %p121, %s14, 1
      %s123 = smul.addr %s122, 2
      %s124 = smul.addr %s123, 8
      %s125 = scalar_lea.vmem %s1, %s124
      %p126 = pneg %p56
      %p127 = pneg %p53
      %p128 = pneg %p82
      %p129 = pneg %p79
      %p130 = scmp.lt.s32.totalorder %s14, 1
      %s131 = scalar_select %p130, %s14, 1
      %s132 = smul.addr %s131, 2
      %s133 = smul.addr %s132, 4
      %s134 = scalar_lea.vmem %s2, %s133
      %p135 = scmp.lt.s32.totalorder %s14, 1
      %s136 = scalar_select %p135, %s14, 1
      %s137 = smul.addr %s136, 2
      %s138 = smul.addr %s137, 8
      %s139 = scalar_lea.vmem %s1, %s138
      %p140 = scmp.lt.s32.totalorder %s14, 1
      %s141 = scalar_select %p140, %s14, 1
      %s142 = smul.addr %s141, 2
      %s143 = smul.addr %s142, 4
      %s144 = scalar_lea.vmem %s2, %s143
      %s146 = sld [smem:[#allocation2]]
      %v147 = vld [vmem:[%s139] sm:$0xff]
      %v148 = vld [vmem:[%s139 + $0x8] sm:$0xff]
      %v149 = vstv %s146
      %vm150 = vcmp.lt.f32.partialorder %v147, %v149
      %vm151 = vcmp.lt.f32.partialorder %v148, %v149
      %v152 = vsel %vm150, 1, 0
      %v153 = vsel %vm151, 1, 0
      %v154 = vcvt.s32.f32 %v152
      %v155 = vcvt.s32.f32 %v153
      %v156 = vpack.c.bf16 %v155, %v154
      %v157 = vlaneseq
      %v158 = vshrl.u32 %v157, 7
      %v159 = vadd.s32 %v158, 8
      %v160 = vlaneseq
      %v161 = vand.u32 %v160, 127
      %v162 = vsub.s32 %v161, %v158
      %v163 = vsub.s32 %v161, %v159
      %vm164 = vcmp.ge.s32.totalorder %v162, 4294967295
      %vm165 = vcmp.ge.s32.totalorder %v163, 4294967295
      %vm166 = vcmp.le.s32.totalorder %v162, 1
      %vm167 = vcmp.le.s32.totalorder %v163, 1
      %vm168 = vmand %vm164, %vm166
      %vm169 = vmand %vm165, %vm167
      %v170 = vsel %vm168, 1, 0
      %v171 = vsel %vm169, 1, 0
      %v172 = vcvt.s32.f32 %v170
      %v173 = vcvt.s32.f32 %v171
      %v174 = vpack.c.bf16 %v173, %v172
      %v175 = vsub.s32 %v158, %v161
      %v176 = vsub.s32 %v159, %v161
      %vm177 = vcmp.ge.s32.totalorder %v175, 4294967295
      %vm178 = vcmp.ge.s32.totalorder %v176, 4294967295
      %vm179 = vcmp.le.s32.totalorder %v175, 1
      %vm180 = vcmp.le.s32.totalorder %v176, 1
      %vm181 = vmand %vm177, %vm179
      %vm182 = vmand %vm178, %vm180
      %v183 = vsel %vm181, 1, 0
      %v184 = vsel %vm182, 1, 0
      %v185 = vcvt.s32.f32 %v183
      %v186 = vcvt.s32.f32 %v184
      %v187 = vpack.c.bf16 %v186, %v185
      %vm188 = vcmask 130048
      %v190 = vsel %vm188, %v156, 0
      %192 = vmatprep.subr.bf16.mxu0 0
      %193 = vmatpush1.bf16.msra.mxu0 0
      %194 = vmatprep.subr.bf16.mxu0 0
      %195 = vmatpush1.bf16.msra.mxu0 0
      %196 = vmatprep.subr.bf16.mxu0 0
      %197 = vmatpush1.bf16.msra.mxu0 0
      %198 = vmatprep.subr.bf16.mxu0 0
      %199 = vmatpush1.bf16.msra.mxu0 0
      %200 = vmatprep.subr.bf16.mxu0 0
      %201 = vmatpush1.bf16.msra.mxu0 0
      %202 = vmatprep.subr.bf16.mxu0 0
      %203 = vmatpush1.bf16.msra.mxu0 0
      %204 = vmatprep.subr.bf16.mxu0 0
      %205 = vmatpush1.bf16.msra.mxu0 0
      %206 = vmatprep.subr.bf16.mxu0 0
      %207 = vmatpush1.bf16.msra.mxu0 %v187
      %208 = vmatprep.subr.bf16.mxu0 0
      %209 = vmatpush2.bf16.msra.mxu0 0
      %210 = vmatprep.subr.bf16.mxu0 0
      %211 = vmatpush2.bf16.msra.mxu0 0
      %212 = vmatprep.subr.bf16.mxu0 0
      %213 = vmatpush2.bf16.msra.mxu0 0
      %214 = vmatprep.subr.bf16.mxu0 0
      %215 = vmatpush2.bf16.msra.mxu0 0
      %216 = vmatprep.subr.bf16.mxu0 0
      %217 = vmatpush2.bf16.msra.mxu0 0
      %218 = vmatprep.subr.bf16.mxu0 0
      %219 = vmatpush2.bf16.msra.mxu0 0
      %220 = vmatprep.subr.bf16.mxu0 0
      %221 = vmatpush2.bf16.msra.mxu0 0
      %222 = vmatprep.subr.bf16.mxu0 0
      %223 = vmatpush2.bf16.msra.mxu0 0
      %224 = vmatprep.mubr.bf16.mxu0 0
      %225 = vmatmul.mubr.bf16.gmra.mxu0 %v190
      %v226 = vpop.f32.mrf.mxu0
      %v227 = vadd.f32 0.0, %v226
      %v228 = vpop.f32.mrf.mxu0
      %v229 = vpop.f32.mrf.mxu0
      %v230 = vadd.f32 0.0, %v229
      %v231 = vpop.f32.mrf.mxu0
      %232 = vdwg.mxu0
      %v233 = vpack.c.bf16 %v230, %v227
      %v235 = vsel %vm188, %v174, 0
      %237 = vmatprep.subr.bf16.mxu0 0
      %238 = vmatpush1.bf16.msra.mxu0 0
      %239 = vmatprep.subr.bf16.mxu0 0
      %240 = vmatpush1.bf16.msra.mxu0 0
      %241 = vmatprep.subr.bf16.mxu0 0
      %242 = vmatpush1.bf16.msra.mxu0 0
      %243 = vmatprep.subr.bf16.mxu0 0
      %244 = vmatpush1.bf16.msra.mxu0 0
      %245 = vmatprep.subr.bf16.mxu0 0
      %246 = vmatpush1.bf16.msra.mxu0 0
      %247 = vmatprep.subr.bf16.mxu0 0
      %248 = vmatpush1.bf16.msra.mxu0 0
      %249 = vmatprep.subr.bf16.mxu0 0
      %250 = vmatpush1.bf16.msra.mxu0 0
      %251 = vmatprep.subr.bf16.mxu0 0
      %252 = vmatpush1.bf16.msra.mxu0 %v233
      %253 = vmatprep.subr.bf16.mxu0 0
      %254 = vmatpush2.bf16.msra.mxu0 0
      %255 = vmatprep.subr.bf16.mxu0 0
      %256 = vmatpush2.bf16.msra.mxu0 0
      %257 = vmatprep.subr.bf16.mxu0 0
      %258 = vmatpush2.bf16.msra.mxu0 0
      %259 = vmatprep.subr.bf16.mxu0 0
      %260 = vmatpush2.bf16.msra.mxu0 0
      %261 = vmatprep.subr.bf16.mxu0 0
      %262 = vmatpush2.bf16.msra.mxu0 0
      %263 = vmatprep.subr.bf16.mxu0 0
      %264 = vmatpush2.bf16.msra.mxu0 0
      %265 = vmatprep.subr.bf16.mxu0 0
      %266 = vmatpush2.bf16.msra.mxu0 0
      %267 = vmatprep.subr.bf16.mxu0 0
      %268 = vmatpush2.bf16.msra.mxu0 0
      %269 = vmatprep.mubr.bf16.mxu0 0
      %270 = vmatmul.mubr.bf16.gmra.mxu0 %v235
      %v271 = vpop.f32.mrf.mxu0
      %v272 = vadd.f32 0.0, %v271
      %v273 = vpop.f32.mrf.mxu0
      %v274 = vpop.f32.mrf.mxu0
      %v275 = vadd.f32 0.0, %v274
      %v276 = vpop.f32.mrf.mxu0
      %277 = vdwg.mxu0
      %vm278 = vcmp.le.f32.partialorder %v272, 0.0
      %vm279 = vcmp.le.f32.partialorder %v275, 0.0
      %v280 = vsel %vm278, 1, 0
      %v281 = vsel %vm279, 1, 0
      %v282 = vcvt.s32.f32 %v280
      %v283 = vcvt.s32.f32 %v281
      %v284 = vpack.c.bf16 %v283, %v282
      %v286 = vunpack.c.l.b16 %v284
      %v287 = vunpack.c.h.b16 %v284
      %v288 = vpack.c.b16 %v286, %v286
      %v289 = vpack.c.b16 %v287, %v287
      %vm292 = vcmask 125952
      %293 = vst.msk [vmem:[%s144] sm:$0xf] %vm292, %v288
      %294 = vst.msk [vmem:[%s144 + $0x4] sm:$0xf] %vm292, %v289
      %p295 = scmp.lt.s32.totalorder %s14, 1
      %s296 = scalar_select %p295, %s14, 1
      %s297 = smul.addr %s296, 2
      %s298 = smul.addr %s297, 4
      %s299 = scalar_lea.vmem %s2, %s298
      // Predicated region
      $region29: #{_dropblock_forward.2} parent=27 // pred_check
        %p300 = pneg %p79
      $region30: #{_dropblock_forward.2} parent=27 // pred_check_branch
        %302 = sbr.rel (%p300) target = $region32
      $region31: #{_dropblock_forward.2} parent=27 // pred_region
        _
      $region32: #{_dropblock_forward.2} parent=27 // pred_fallthru
        _
    $region28: #{_dropblock_forward.2} parent=5 // pred_fallthru
      _
    %p303 = scmp.le.s32.totalorder 2, %s9
    // Predicated region
    $region33: #{_dropblock_forward.2} parent=5 // pred_check
      %p304 = pneg %p303
    $region34: #{_dropblock_forward.2} parent=5 // pred_check_branch
      %306 = sbr.rel (%p304) target = $region36
    $region35: #{_dropblock_forward.2} parent=5 // pred_region
      %s307 = ssub.s32 %s9, 2
      // Predicated region
      $region37: #{_dropblock_forward.2} parent=35 // pred_check
        %p308 = pneg %p85
      $region38: #{_dropblock_forward.2} parent=35 // pred_check_branch
        %310 = sbr.rel (%p308) target = $region40
      $region39: #{_dropblock_forward.2} parent=35 // pred_region
        %p311 = scmp.lt.s32.totalorder %s15, 1
        %s312 = scalar_select %p311, %s15, 1
        %s313 = smul.addr %s312, 2
        %s314 = smul.addr %s313, 4
        %s315 = scalar_lea.vmem %s2, %s314
      $region40: #{_dropblock_forward.2} parent=35 // pred_fallthru
        _
    $region36: #{_dropblock_forward.2} parent=5 // pred_fallthru
      _
  $region6: #{_dropblock_forward.2} parent=0 // loop_footer
    %s13 = sadd.s32 1, %s9
  $region7: #{_dropblock_forward.2} parent=0 // loop_footer_branch
    %8 = sbr.rel target = $region3
  $region8: #{_dropblock_forward.2} parent=0 // loop_exit
    _

</llo_original>
